<compile_context>
chip_gen: v7x
topology: tpu7x:2x2x1
jax: 0.10.0
libtpu: 0.0.40
codegen_flags: <defaults>
</compile_context>

<pallas_src>
import functools

import jax
import jax.numpy as jnp
from jax import lax
from jax.experimental import pallas as pl
from jax.experimental.pallas import tpu as pltpu


# ---------------------------------------------------------------------------
# Stage 1: row-tiled linear projection  y = x @ W   (nn.Linear, bias=False)
# ---------------------------------------------------------------------------
def _linear_kernel(x_ref, w_ref, o_ref, *, compute_dtype):
    x = x_ref[...].astype(compute_dtype)
    w = w_ref[...].astype(compute_dtype)
    o_ref[...] = jnp.dot(x, w, preferred_element_type=jnp.float32).astype(o_ref.dtype)


def _linear(x2d, w, *, compute_dtype, out_dtype, row_tile=512):
    M, Cin = x2d.shape
    Cout = w.shape[1]
    tm = M if M <= row_tile else row_tile           # tm is full-dim or a multiple of 8
    grid = (pl.cdiv(M, tm),)
    kernel = functools.partial(_linear_kernel, compute_dtype=compute_dtype)
    return pl.pallas_call(
        kernel,
        out_shape=jax.ShapeDtypeStruct((M, Cout), out_dtype),
        grid_spec=pltpu.PrefetchScalarGridSpec(
            num_scalar_prefetch=0,
            grid=grid,
            in_specs=[
                pl.BlockSpec((tm, Cin), lambda i: (i, 0)),
                pl.BlockSpec((Cin, Cout), lambda i: (0, 0)),
            ],
            out_specs=pl.BlockSpec((tm, Cout), lambda i: (i, 0)),
        ),
        compiler_params=pltpu.CompilerParams(dimension_semantics=("parallel",)),
    )(x2d, w)


# ---------------------------------------------------------------------------
# Stage 2: per-(batch, query-tile) attention + incremental fc + residual
# ---------------------------------------------------------------------------
def _attn_kernel(qp_ref, kp_ref, vp_ref, wfc_ref, res_ref, out_ref, attn_ref, *,
                 n_head, d_head, inv_temp, compute_dtype):
    # Query tile and full K/V for this batch element (heads interleaved on C).
    # Scale Q by 1/temperature ONCE (hoisted out of the head loop).
    q_scaled = (qp_ref[0].astype(jnp.float32) * inv_temp).astype(compute_dtype)  # (tq, C)
    kx = kp_ref[0]                                                               # (Nk, C)
    vx = vp_ref[0]                                                               # (Nk, C)

    # f32 accumulator initialized with the residual; fc projection is accumulated
    # head-by-head (replaces head_outs + concatenate + one wide matmul).
    acc = res_ref[0].astype(jnp.float32)                                         # (tq, C)

    nt_dims = (((1,), (1,)), ((), ()))    # contract d_head axes: Qh (tq,d) x Kh (Nk,d)
    for h in range(n_head):               # static unroll over heads
        sl = slice(h * d_head, (h + 1) * d_head)
        qh = q_scaled[:, sl]                                                     # (tq, d)
        kh = kx[:, sl].astype(compute_dtype)                                     # (Nk, d)
        vh = vx[:, sl].astype(compute_dtype)                                     # (Nk, d)

        # scores = qh @ kh.T without an explicit transpose.
        scores = lax.dot_general(qh, kh, nt_dims,
                                 preferred_element_type=jnp.float32)             # (tq, Nk)
        scores = scores - jnp.max(scores, axis=-1, keepdims=True)
        e = jnp.exp(scores)                                                      # f32
        # Exact reciprocal of the (tq,1) column, then broadcast multiply
        # (cheaper than dividing the full (tq,Nk) matrix; exact -> keeps 1e-5 attn tol).
        inv_den = pl.reciprocal(jnp.sum(e, axis=-1, keepdims=True), approx=False)
        p = e * inv_den                                                          # softmax
        attn_ref[0, h, :, :] = p.astype(attn_ref.dtype)

        ctx = jnp.dot(p.astype(compute_dtype), vh,
                      preferred_element_type=jnp.float32)                        # (tq, d)
        # Incremental output projection: acc += ctx @ wfc[h*d:(h+1)*d, :]
        acc += jnp.dot(ctx.astype(compute_dtype),
                       wfc_ref[sl, :].astype(compute_dtype),
                       preferred_element_type=jnp.float32)                       # (tq, C)

    out_ref[0] = acc.astype(out_ref.dtype)


def multi_head_attention(q, k, v, wq, wk, wv, wfc, *, n_head,
                         compute_dtype=jnp.float32, attn_dtype=jnp.float32,
                         q_tile=256):
    """q: (B, Nq, C); k, v: (B, Nk, C).  wq/wk/wv/wfc: (C, C) stored for x @ W."""
    B, Nq, C = q.shape
    _, Nk, Ck = k.shape
    assert k.shape == v.shape and Ck == C
    d_head = C // n_head
    assert n_head * d_head == C
    inv_temp = 1.0 / (float(d_head) ** 0.5)

    # ---- Stage 1: fused big projections (one (B*N, C) x (C, C) matmul per weight).
    qp = _linear(q.reshape(B * Nq, C), wq, compute_dtype=compute_dtype,
                 out_dtype=compute_dtype).reshape(B, Nq, C)
    kp = _linear(k.reshape(B * Nk, C), wk, compute_dtype=compute_dtype,
                 out_dtype=compute_dtype).reshape(B, Nk, C)
    vp = _linear(v.reshape(B * Nk, C), wv, compute_dtype=compute_dtype,
                 out_dtype=compute_dtype).reshape(B, Nk, C)

    # ---- Stage 2: attention, tiled over (batch, query tile).
    tq = Nq if Nq <= q_tile else q_tile             # tq is full-dim or a multiple of 8
    n_qt = pl.cdiv(Nq, tq)

    kernel = functools.partial(
        _attn_kernel, n_head=n_head, d_head=d_head, inv_temp=inv_temp,
        compute_dtype=compute_dtype)

    grid_spec = pltpu.PrefetchScalarGridSpec(
        num_scalar_prefetch=0,
        grid=(B, n_qt),
        in_specs=[
            pl.BlockSpec((1, tq, C), lambda b, i: (b, i, 0)),        # projected Q tile
            pl.BlockSpec((1, Nk, C), lambda b, i: (b, 0, 0)),        # projected K (full)
            pl.BlockSpec((1, Nk, C), lambda b, i: (b, 0, 0)),        # projected V (full)
            pl.BlockSpec((C, C), lambda b, i: (0, 0)),               # wfc
            pl.BlockSpec((1, tq, C), lambda b, i: (b, i, 0)),        # residual (= q)
        ],
        out_specs=[
            pl.BlockSpec((1, tq, C), lambda b, i: (b, i, 0)),              # out
            pl.BlockSpec((1, n_head, tq, Nk), lambda b, i: (b, 0, i, 0)),  # attn
        ],
    )

    out_shapes = (
        jax.ShapeDtypeStruct((B, Nq, C), q.dtype),
        jax.ShapeDtypeStruct((B, n_head, Nq, Nk), attn_dtype),
    )

    return pl.pallas_call(
        kernel,
        out_shape=out_shapes,
        grid_spec=grid_spec,
        compiler_params=pltpu.CompilerParams(
            dimension_semantics=("parallel", "parallel")),
    )(qp, kp, vp, wfc, q)


def _reference(q, k, v, wq, wk, wv, wfc, *, n_head):
    """Pure-JAX reference mirroring the PyTorch forward (eval mode, mask=None)."""
    B, Nq, C = q.shape
    Nk = k.shape[1]
    d = C // n_head
    temp = float(d) ** 0.5
    Q = (q @ wq).reshape(B, Nq, n_head, d).transpose(0, 2, 1, 3)
    K = (k @ wk).reshape(B, Nk, n_head, d).transpose(0, 2, 1, 3)
    V = (v @ wv).reshape(B, Nk, n_head, d).transpose(0, 2, 1, 3)
    attn = jnp.einsum("bhqd,bhkd->bhqk", Q / temp, K)
    attn = jax.nn.softmax(attn, axis=-1)
    o = jnp.einsum("bhqk,bhkd->bhqd", attn, V)
    o = o.transpose(0, 2, 1, 3).reshape(B, Nq, C)
    out = o @ wfc + q
    return out, attn


if __name__ == "__main__":
    # Small shapes: batch=2, seq=8, channels=32, heads=4 (d_head=8).
    B, N, C, H = 2, 8, 32, 4
    key = jax.random.PRNGKey(0)
    kq, kk, kv, k1, k2, k3, k4 = jax.random.split(key, 7)

    q = jax.random.normal(kq, (B, N, C), dtype=jnp.float32)
    k = jax.random.normal(kk, (B, N, C), dtype=jnp.float32)
    v = jax.random.normal(kv, (B, N, C), dtype=jnp.float32)

    # Deterministic parameter init (nn.Linear(C, C, bias=False) weights, pre-transposed).
    wq = 0.1 * jax.random.normal(k1, (C, C), dtype=jnp.float32)
    wk = 0.1 * jax.random.normal(k2, (C, C), dtype=jnp.float32)
    wv = 0.1 * jax.random.normal(k3, (C, C), dtype=jnp.float32)
    wfc = 0.1 * jax.random.normal(k4, (C, C), dtype=jnp.float32)

    ref_out, ref_attn = _reference(q, k, v, wq, wk, wv, wfc, n_head=H)

    # f32 compute path: tight tolerances against the reference.
    out, attn = multi_head_attention(q, k, v, wq, wk, wv, wfc, n_head=H,
                                     compute_dtype=jnp.float32)
    out = jax.block_until_ready(out)
    attn = jax.block_until_ready(attn)
    assert out.shape == (B, N, C)
    assert attn.shape == (B, H, N, N)
    assert jnp.allclose(out, ref_out, atol=1e-4, rtol=1e-4)
    assert jnp.allclose(attn, ref_attn, atol=1e-5, rtol=1e-5)

    # bf16-MXU performance path: looser tolerances against the f32 reference.
    out_bf, attn_bf = multi_head_attention(q, k, v, wq, wk, wv, wfc, n_head=H,
                                           compute_dtype=jnp.bfloat16)
    out_bf = jax.block_until_ready(out_bf)
    attn_bf = jax.block_until_ready(attn_bf)
    assert jnp.allclose(out_bf, ref_out, atol=5e-2, rtol=5e-2)
    assert jnp.allclose(attn_bf, ref_attn, atol=2e-2, rtol=2e-2)

    print("KERNEL_OK")
</pallas_src>

<mosaic_0001>
module attributes {stable_mosaic.version = 11 : i64} {
  func.func @_linear_kernel(%arg0: i32, %arg1: memref<16x32xf32, #tpu.memory_space<vmem>>, %arg2: memref<32x32xf32, #tpu.memory_space<vmem>>, %arg3: memref<16x32xf32, #tpu.memory_space<vmem>>) attributes {dimension_semantics = [#tpu.dimension_semantics<parallel>], iteration_bounds = array<i64: 1>, scalar_prefetch = 0 : i64, scratch_operands = 0 : i64, tpu.core_type = #tpu.core_type<tc>, window_params = [{transform_indices = @transform_0, window_bounds = array<i64: 16, 32>}, {pipeline_mode = #tpu.pipeline_mode<synchronous>, transform_indices = @transform_1, window_bounds = array<i64: 32, 32>}, {transform_indices = @transform_2, window_bounds = array<i64: 16, 32>}]} {
    %c0 = arith.constant 0 : index
    %c0_0 = arith.constant 0 : index
    %0 = vector.load %arg1[%c0, %c0_0] : memref<16x32xf32, #tpu.memory_space<vmem>>, vector<16x32xf32>
    %c0_1 = arith.constant 0 : index
    %c0_2 = arith.constant 0 : index
    %1 = vector.load %arg2[%c0_1, %c0_2] : memref<32x32xf32, #tpu.memory_space<vmem>>, vector<32x32xf32>
    %cst = arith.constant dense<0.000000e+00> : vector<16x32xf32>
    %2 = tpu.matmul %0, %1, %cst {dimension_numbers = #tpu.dot_dimension_numbers<[1], [0], [0], [1], [0, 0, 1, 1], [], []>} : vector<16x32xf32>, vector<32x32xf32>, vector<16x32xf32> -> vector<16x32xf32>
    %c0_3 = arith.constant 0 : index
    %c0_4 = arith.constant 0 : index
    %3 = vector.load %arg3[%c0_3, %c0_4] : memref<16x32xf32, #tpu.memory_space<vmem>>, vector<16x32xf32>
    tpu.vector_store %arg3[%c0_3, %c0_4], %2 {strides = array<i32>} : memref<16x32xf32, #tpu.memory_space<vmem>>, vector<16x32xf32>,
    return
  }
  func.func @transform_0(%arg0: i32) -> (i32, i32) {
    %c0_i32 = arith.constant 0 : i32
    %c0_i32_0 = arith.constant 0 : i32
    return %arg0, %c0_i32 : i32, i32
  }
  func.func @transform_1(%arg0: i32) -> (i32, i32) {
    %c0_i32 = arith.constant 0 : i32
    %c0_i32_0 = arith.constant 0 : i32
    %c0_i32_1 = arith.constant 0 : i32
    return %c0_i32, %c0_i32_0 : i32, i32
  }
  func.func @transform_2(%arg0: i32) -> (i32, i32) {
    %c0_i32 = arith.constant 0 : i32
    %c0_i32_0 = arith.constant 0 : i32
    return %arg0, %c0_i32 : i32, i32
  }
}

</mosaic_0001>

<llo_original>
// kernel: tpu_custom_call.1
$region0: #{tpu_custom_call.1}
  #allocation0 [shape = 'u32[]', space=smem, size = 0x4, offset = 0x4, fixed_abs, tag = 'smem constant byte address 0x4 - core index']
  #allocation1 [shape = 'u32[144,128]{1,0:T(1,128)}', space=vmem, size = 0x12000, scoped, tag = 'internal scratch']
  %s0 = inlined_call_operand.hbm [shape: f32[16,32], index: 0, kind: input, shape index: {}]
  %s1 = inlined_call_operand.hbm [shape: f32[32,32], index: 1, kind: input, shape index: {}]
  %s2 = inlined_call_operand.hbm [shape: f32[16,32], index: 2, kind: output, shape index: {}]
  %s3 = sld [smem:[#allocation0]]
  $region26: #{tpu_custom_call.1} parent=0
    _
  %s5 = ssub.s32 1, %s3
  %s6 = scalar_select 0, %s5, %s3
  $region1: #{tpu_custom_call.1} parent=0
    #allocation2 [shape = 'u8[8192]{0}', space=vmem, size = 0x2000, scoped, tag = 'input window, operand 0, single buffered']
    #allocation3 [shape = 's32[1]{0}', space=sflag, size = 0x4, scoped, tag = 'scoped memory for tpu_custom_call.1']
    #allocation4 [shape = 's32[1]{0}', space=sflag, size = 0x4, scoped, tag = 'scoped memory for tpu_custom_call.1']
    #allocation5 [shape = 'u8[16384]{0}', space=vmem, size = 0x4000, scoped, tag = 'input window, operand 1, single buffered']
    #allocation6 [shape = 's32[1]{0}', space=sflag, size = 0x4, scoped, tag = 'scoped memory for tpu_custom_call.1']
    #allocation7 [shape = 'u8[8192]{0}', space=vmem, size = 0x2000, scoped, tag = 'output window, operand 0, single buffered']
    %7 = vsyncpa [#allocation3], 0
    %8 = vsyncpa [#allocation6], 0
    %9 = vsyncpa [#allocation4], 0
    // Predicated region
    $region2: #{tpu_custom_call.1} parent=1 // pred_check
      _
    $region3: #{tpu_custom_call.1} parent=1 // pred_check_branch
      %11 = sbr.rel (0) target = $region5
    $region4: #{tpu_custom_call.1} parent=1 // pred_region
      %s13 = ssub.s32 256, 256
      %14 = vsyncadd [#allocation3], %s13
      %s15 = sshll.u32 [#allocation2], 4
      %s16 = int_to_ptr.vmem [resolvable:$true] %s15
      %21 = dma.hbm_to_vmem [thread:$0]  %s0, 256, %s16, [#allocation3], 128, 128, 8
    $region5: #{tpu_custom_call.1} parent=1 // pred_fallthru
      _
    // Predicated region
    $region6: #{tpu_custom_call.1} parent=1 // pred_check
      _
    $region7: #{tpu_custom_call.1} parent=1 // pred_check_branch
      %23 = sbr.rel (0) target = $region9
    $region8: #{tpu_custom_call.1} parent=1 // pred_region
      %s25 = ssub.s32 512, 512
      %26 = vsyncadd [#allocation6], %s25
      %s27 = sshll.u32 [#allocation5], 4
      %s28 = int_to_ptr.vmem [resolvable:$true] %s27
      %33 = dma.hbm_to_vmem [thread:$0]  %s1, 512, %s28, [#allocation6], 128, 128, 8
    $region9: #{tpu_custom_call.1} parent=1 // pred_fallthru
      _
    // Predicated region
    $region10: #{tpu_custom_call.1} parent=1 // pred_check
      _
    $region11: #{tpu_custom_call.1} parent=1 // pred_check_branch
      %35 = sbr.rel (0) target = $region13
    $region12: #{tpu_custom_call.1} parent=1 // pred_region
      %36 = dma.done [#allocation3], 256
    $region13: #{tpu_custom_call.1} parent=1 // pred_fallthru
      _
    // Predicated region
    $region14: #{tpu_custom_call.1} parent=1 // pred_check
      _
    $region15: #{tpu_custom_call.1} parent=1 // pred_check_branch
      %38 = sbr.rel (0) target = $region17
    $region16: #{tpu_custom_call.1} parent=1 // pred_region
      %39 = dma.done [#allocation6], 512
    $region17: #{tpu_custom_call.1} parent=1 // pred_fallthru
      _
    %v40 = vld [vmem:[#allocation2] sm:$0xff]
    %v41 = vld [vmem:[#allocation2 + $0x8] sm:$0xff]
    %v42 = vld [vmem:[#allocation5] sm:$0xff]
    %v43 = vld [vmem:[#allocation5 + $0x8] sm:$0xff]
    %v44 = vld [vmem:[#allocation5 + $0x10] sm:$0xff]
    %v45 = vld [vmem:[#allocation5 + $0x18] sm:$0xff]
    %vm46 = vcmask 261120
    %v48 = vsel %vm46, %v40, 0
    %v51 = vsel %vm46, %v41, 0
    %53 = vmatprep.subr.mxu0 0.0
    %54 = vmatpush1.msra.mxu0 %v42
    %55 = vmatprep.subr.mxu0 0.0
    %56 = vmatpush1.msra.mxu0 %v43
    %57 = vmatprep.subr.mxu0 0.0
    %58 = vmatpush1.msra.mxu0 %v44
    %59 = vmatprep.subr.mxu0 0.0
    %60 = vmatpush1.msra.mxu0 %v45
    %61 = vmatprep.subr.mxu0 0.0
    %62 = vmatpush1.msra.mxu0 0.0
    %63 = vmatprep.subr.mxu0 0.0
    %64 = vmatpush1.msra.mxu0 0.0
    %65 = vmatprep.subr.mxu0 0.0
    %66 = vmatpush1.msra.mxu0 0.0
    %67 = vmatprep.subr.mxu0 0.0
    %68 = vmatpush1.msra.mxu0 0.0
    %69 = vmatprep.subr.mxu0 0.0
    %70 = vmatpush1.msra.mxu0 0.0
    %71 = vmatprep.subr.mxu0 0.0
    %72 = vmatpush1.msra.mxu0 0.0
    %73 = vmatprep.subr.mxu0 0.0
    %74 = vmatpush1.msra.mxu0 0.0
    %75 = vmatprep.subr.mxu0 0.0
    %76 = vmatpush1.msra.mxu0 0.0
    %77 = vmatprep.subr.mxu0 0.0
    %78 = vmatpush1.msra.mxu0 0.0
    %79 = vmatprep.subr.mxu0 0.0
    %80 = vmatpush1.msra.mxu0 0.0
    %81 = vmatprep.subr.mxu0 0.0
    %82 = vmatpush1.msra.mxu0 0.0
    %83 = vmatprep.subr.mxu0 0.0
    %84 = vmatpush1.msra.mxu0 0.0
    %85 = vmatprep.subr.mxu0 0.0
    %86 = vmatpush1.msra.mxu0 0.0
    %87 = vmatprep.subr.mxu0 0.0
    %88 = vmatpush1.msra.mxu0 0.0
    %89 = vmatprep.subr.mxu0 0.0
    %90 = vmatpush1.msra.mxu0 0.0
    %91 = vmatprep.subr.mxu0 0.0
    %92 = vmatpush1.msra.mxu0 0.0
    %93 = vmatprep.subr.mxu0 0.0
    %94 = vmatpush1.msra.mxu0 0.0
    %95 = vmatprep.subr.mxu0 0.0
    %96 = vmatpush1.msra.mxu0 0.0
    %97 = vmatprep.subr.mxu0 0.0
    %98 = vmatpush1.msra.mxu0 0.0
    %99 = vmatprep.subr.mxu0 0.0
    %100 = vmatpush1.msra.mxu0 0.0
    %101 = vmatprep.subr.mxu0 0.0
    %102 = vmatpush1.msra.mxu0 0.0
    %103 = vmatprep.subr.mxu0 0.0
    %104 = vmatpush1.msra.mxu0 0.0
    %105 = vmatprep.subr.mxu0 0.0
    %106 = vmatpush1.msra.mxu0 0.0
    %107 = vmatprep.subr.mxu0 0.0
    %108 = vmatpush1.msra.mxu0 0.0
    %109 = vmatprep.subr.mxu0 0.0
    %110 = vmatpush1.msra.mxu0 0.0
    %111 = vmatprep.subr.mxu0 0.0
    %112 = vmatpush1.msra.mxu0 0.0
    %113 = vmatprep.subr.mxu0 0.0
    %114 = vmatpush1.msra.mxu0 0.0
    %115 = vmatprep.subr.mxu0 0.0
    %116 = vmatpush1.msra.mxu0 0.0
    %117 = vmatprep.mubr.f32.mxu0 0.0
    %118 = vmatmul.mubr.f32.gmra.mrb[0].mxu0 %v48
    %v119 = vpop.f32.mrb[0].mxu0
    %v120 = vadd.f32 0.0, %v119
    %v121 = vpop.f32.mrb[0].mxu0
    %122 = vmatprep.mubr.f32.mxu0 0.0
    %123 = vmatmul.mubr.f32.gmra.mrb[0].mxu0 %v51
    %v124 = vpop.f32.mrb[0].mxu0
    %v125 = vadd.f32 0.0, %v124
    %v126 = vpop.f32.mrb[0].mxu0
    %127 = vdwg.mxu0
    %128 = vst.msk [vmem:[#allocation7] sm:$0xff] %vm46, %v120
    %129 = vst.msk [vmem:[#allocation7 + $0x8] sm:$0xff] %vm46, %v125
    // Predicated region
    $region18: #{tpu_custom_call.1} parent=1 // pred_check
      _
    $region19: #{tpu_custom_call.1} parent=1 // pred_check_branch
      %131 = sbr.rel (0) target = $region21
    $region20: #{tpu_custom_call.1} parent=1 // pred_region
      %s133 = ssub.s32 256, 256
      %134 = vsyncadd [#allocation4], %s133
      %s135 = sshll.u32 [#allocation7], 4
      %s136 = int_to_ptr.vmem [resolvable:$true] %s135
      %141 = dma.vmem_to_hbm [thread:$0]  %s136, 256, %s2, [#allocation4], 128, 128, 8
    $region21: #{tpu_custom_call.1} parent=1 // pred_fallthru
      _
    // Predicated region
    $region22: #{tpu_custom_call.1} parent=1 // pred_check
      _
    $region23: #{tpu_custom_call.1} parent=1 // pred_check_branch
      %143 = sbr.rel (0) target = $region25
    $region24: #{tpu_custom_call.1} parent=1 // pred_region
      %144 = dma.done [#allocation4], 256
    $region25: #{tpu_custom_call.1} parent=1 // pred_fallthru
      _
    %145 = vsyncpa [#allocation3], 1
    %146 = vsyncpa [#allocation6], 1
    %147 = vsyncpa [#allocation4], 1

</llo_original>
